<compile_context>
chip_gen: v6e
topology: v6e:2x2x1
jax: 0.10.0
libtpu: 0.0.40
codegen_flags: <defaults>
</compile_context>

<pallas_src>
import functools

import jax
import jax.numpy as jnp
from jax.experimental import pallas as pl
from jax.experimental.pallas import tpu as pltpu


def _align8(x):
    return (x + 7) // 8 * 8


def ccfcrec_kernel(attribute_ref, feats_ref, params_ref, out_ref, *,
                   A, P, I2, offs):
    """One batch tile of the CCFCRec generator forward.

    attribute_ref : (TB, A)  int32  attribute ids, -1 == missing
    feats_ref     : (TB, 2I) f32    [artist | album] rows
    params_ref    : (R, C)   f32    packed weight slab (layout set by wrapper)
    out_ref       : (TB, C)  f32    lane-dense output; cols [:P] hold q_v_c
    """
    off_z, off_ma, off_w1f, off_g1b, off_g2w, off_g2b = offs
    TB = attribute_ref.shape[0]

    # ---- masked softmax over the attribute axis (z_v precomputed) ----------
    z_row = params_ref[off_z:off_z + 1, :A]                        # (1, A)
    mask = attribute_ref[...] != -1
    z_b = jnp.broadcast_to(z_row, (TB, A))
    z_masked = jnp.where(mask, z_b, jnp.float32(-1000000.0))
    m = jnp.max(z_masked, axis=1, keepdims=True)
    e = jnp.exp(z_masked - m)
    denom = jnp.sum(e, axis=1, keepdims=True)
    inv = pl.reciprocal(denom, approx=True)        # EUP seed ...
    inv = inv * (jnp.float32(2.0) - denom * inv)   # ... + one Newton step
    attn = e * inv                                                 # (TB, A)

    # ---- gen_layer1, folded:  attn @ (attr_matrix @ W1_attr) + feats @ W1_f
    m_attr = params_ref[off_ma:off_ma + A, :P]                     # (A, P)
    w1_f = params_ref[off_w1f:off_w1f + I2, :P]                    # (2I, P)
    g1_b = params_ref[off_g1b:off_g1b + 1, :P]                     # (1, P)
    h1 = (jnp.dot(attn, m_attr, preferred_element_type=jnp.float32)
          + jnp.dot(feats_ref[...], w1_f, preferred_element_type=jnp.float32)
          + g1_b)
    # LeakyReLU (negative_slope = 0.01, PyTorch default)
    h1 = jnp.where(h1 > 0, h1, jnp.float32(0.01) * h1)

    # ---- gen_layer2 (lane-dense: weight/bias zero-padded to C columns) -----
    g2_w = params_ref[off_g2w:off_g2w + P, :]                      # (P, C)
    g2_b = params_ref[off_g2b:off_g2b + 1, :]                      # (1, C)
    out_ref[...] = (jnp.dot(h1, g2_w, preferred_element_type=jnp.float32)
                    + g2_b)


def ccfcrec_forward(attribute, artist, album, params, *, tile_b=256):
    """Wrapper: hoists weight-only math, packs operands, tiles the batch."""
    B, A = attribute.shape
    I = artist.shape[1]
    I2 = 2 * I
    P = params["attr_matrix"].shape[1]

    # Lane-dense slab / output width.
    C = max(128, pl.cdiv(P, 128) * 128)
    assert A <= C and P <= C

    attr_matrix = params["attr_matrix"]                          # (A, P)

    # ---- weight-only preprocessing (hoisted out of the kernel) -------------
    z_col = (attr_matrix @ params["attr_W1"]
             + params["attr_b1"][:, 0]) @ params["attr_W2"]      # (A, 1)
    z_row = z_col[:, 0]                                          # (A,)

    g1_wT = params["gen1_w"].T                                   # (P+2I, P)
    m_attr = attr_matrix @ g1_wT[:P, :]                          # (A, P) fold
    w1_f = g1_wT[P:, :]                                          # (2I, P)
    g1_b = params["gen1_b"]                                      # (P,)
    g2_wT = params["gen2_w"].T                                   # (P, P)
    g2_b = params["gen2_b"]                                      # (P,)

    # ---- pack all weight-derived operands into one (R, C) slab -------------
    off_z = 0
    off_ma = _align8(off_z + 1)
    off_w1f = _align8(off_ma + A)
    off_g1b = _align8(off_w1f + I2)
    off_g2w = _align8(off_g1b + 1)
    off_g2b = _align8(off_g2w + P)
    R = _align8(off_g2b + 1)

    slab = jnp.zeros((R, C), jnp.float32)
    slab = slab.at[off_z, :A].set(z_row)
    slab = slab.at[off_ma:off_ma + A, :P].set(m_attr)
    slab = slab.at[off_w1f:off_w1f + I2, :P].set(w1_f)
    slab = slab.at[off_g1b, :P].set(g1_b)
    slab = slab.at[off_g2w:off_g2w + P, :P].set(g2_wT)
    slab = slab.at[off_g2b, :P].set(g2_b)

    # ---- batch tiling -------------------------------------------------------
    feats = jnp.concatenate([artist, album], axis=1).astype(jnp.float32)
    TB = _align8(min(tile_b, _align8(B)))
    B_pad = pl.cdiv(B, TB) * TB
    if B_pad != B:
        attribute = jnp.pad(attribute, ((0, B_pad - B), (0, 0)))
        feats = jnp.pad(feats, ((0, B_pad - B), (0, 0)))
    grid = (B_pad // TB,)

    flops = 2 * B_pad * (A * P + I2 * P + P * C) + 6 * B_pad * A
    transcendentals = B_pad * A + B_pad
    bytes_accessed = (attribute.size * 4 + feats.size * 4
                      + R * C * 4 + B_pad * C * 4)

    kernel = functools.partial(
        ccfcrec_kernel, A=A, P=P, I2=I2,
        offs=(off_z, off_ma, off_w1f, off_g1b, off_g2w, off_g2b))

    out_padded = pl.pallas_call(
        kernel,
        out_shape=jax.ShapeDtypeStruct((B_pad, C), jnp.float32),
        grid_spec=pltpu.PrefetchScalarGridSpec(
            num_scalar_prefetch=0,
            grid=grid,
            in_specs=[
                pl.BlockSpec((TB, A), lambda i: (i, 0)),    # attribute ids
                pl.BlockSpec((TB, I2), lambda i: (i, 0)),   # [artist|album]
                pl.BlockSpec((R, C), lambda i: (0, 0)),     # resident weights
            ],
            out_specs=pl.BlockSpec((TB, C), lambda i: (i, 0)),
        ),
        compiler_params=pltpu.CompilerParams(
            dimension_semantics=("parallel",),
        ),
        cost_estimate=pl.CostEstimate(
            flops=flops,
            transcendentals=transcendentals,
            bytes_accessed=bytes_accessed),
    )(attribute, feats, slab)

    return out_padded[:B, :P]


def ccfcrec_reference(attribute, artist, album, params):
    """Pure-JAX reference (mirrors the PyTorch forward)."""
    attr_matrix = params["attr_matrix"]
    z_v = (attr_matrix @ params["attr_W1"]
           + params["attr_b1"][:, 0]) @ params["attr_W2"]
    z_v_sq = jnp.broadcast_to(z_v[:, 0][None, :], attribute.shape)
    z_mask = jnp.where(attribute != -1, z_v_sq, jnp.float32(-1000000.0))
    attn = jax.nn.softmax(z_mask, axis=1)
    final_attr = attn @ attr_matrix
    q_v_a = jnp.concatenate([final_attr, artist, album], axis=1)
    h1 = q_v_a @ params["gen1_w"].T + params["gen1_b"]
    h1 = jnp.where(h1 > 0, h1, 0.01 * h1)
    return h1 @ params["gen2_w"].T + params["gen2_b"]


def _xavier_normal(key, shape):
    fan_out, fan_in = shape[0], shape[1]
    std = (2.0 / (fan_in + fan_out)) ** 0.5
    return std * jax.random.normal(key, shape, dtype=jnp.float32)


if __name__ == "__main__":
    # Small synthetic config consistent with the module's __init__.
    # B=24 with tile_b=8 exercises a 3-step batch grid.
    B, A, P, I = 24, 18, 32, 48   # batch, attr_num, attr_present_dim, implicit_dim

    key = jax.random.PRNGKey(0)
    keys = jax.random.split(key, 12)

    params = {
        "attr_matrix": _xavier_normal(keys[0], (A, P)),
        "attr_W1":     _xavier_normal(keys[1], (P, P)),
        "attr_b1":     _xavier_normal(keys[2], (P, 1)),
        "attr_W2":     _xavier_normal(keys[3], (P, 1)),
        "gen1_w":      _xavier_normal(keys[4], (P, P + 2 * I)),
        "gen1_b":      0.01 * jax.random.normal(keys[5], (P,), dtype=jnp.float32),
        "gen2_w":      _xavier_normal(keys[6], (P, P)),
        "gen2_b":      0.01 * jax.random.normal(keys[7], (P,), dtype=jnp.float32),
    }

    # Inputs: attribute ids with -1 marking "missing" attributes; artist/album
    # embeddings are pre-gathered (B, I) rows (as in the PyTorch forward).
    attribute = jnp.where(
        jax.random.uniform(keys[8], (B, A)) < 0.5,
        jax.random.randint(keys[9], (B, A), 0, A),
        jnp.int32(-1),
    ).astype(jnp.int32)
    artist = jax.random.normal(keys[10], (B, I), dtype=jnp.float32)
    album = jax.random.normal(keys[11], (B, I), dtype=jnp.float32)

    out = ccfcrec_forward(attribute, artist, album, params, tile_b=8)
    out = jax.block_until_ready(out)

    ref = ccfcrec_reference(attribute, artist, album, params)
    assert out.shape == (B, P)
    # Tolerance allows for the approx-reciprocal (+Newton) softmax denominator
    # and the algebraic fold of final_attr @ W1_attr.
    assert jnp.allclose(out, ref, atol=1e-3, rtol=1e-3), "mismatch vs reference"

    print("KERNEL_OK")
</pallas_src>

<mosaic_0001>
module attributes {stable_mosaic.version = 11 : i64} {
  func.func @ccfcrec_kernel(%arg0: i32, %arg1: memref<8x18xi32, #tpu.memory_space<vmem>>, %arg2: memref<8x96xf32, #tpu.memory_space<vmem>>, %arg3: memref<176x128xf32, #tpu.memory_space<vmem>>, %arg4: memref<8x128xf32, #tpu.memory_space<vmem>>) attributes {dimension_semantics = [#tpu.dimension_semantics<parallel>], iteration_bounds = array<i64: 3>, scalar_prefetch = 0 : i64, scratch_operands = 0 : i64, tpu.core_type = #tpu.core_type<tc>, window_params = [{transform_indices = @transform_0, window_bounds = array<i64: 8, 18>}, {transform_indices = @transform_1, window_bounds = array<i64: 8, 96>}, {pipeline_mode = #tpu.pipeline_mode<synchronous>, transform_indices = @transform_2, window_bounds = array<i64: 176, 128>}, {transform_indices = @transform_3, window_bounds = array<i64: 8, 128>}]} {
    %c0 = arith.constant 0 : index
    %c0_0 = arith.constant 0 : index
    %0 = vector.load %arg3[%c0, %c0_0] : memref<176x128xf32, #tpu.memory_space<vmem>>, vector<1x18xf32>
    %c0_1 = arith.constant 0 : index
    %c0_2 = arith.constant 0 : index
    %1 = vector.load %arg1[%c0_1, %c0_2] : memref<8x18xi32, #tpu.memory_space<vmem>>, vector<8x18xi32>
    %c-1_i32 = arith.constant -1 : i32
    %2 = vector.broadcast %c-1_i32 : i32 to vector<8x18xi32>
    %3 = arith.cmpi ne, %1, %2 : vector<8x18xi32>
    %4 = vector.shape_cast %0 : vector<1x18xf32> to vector<1x18xf32>
    %5 = vector.broadcast %4 : vector<1x18xf32> to vector<8x18xf32>
    %cst = arith.constant -1.000000e+06 : f32
    %6 = vector.broadcast %cst : f32 to vector<8x18xf32>
    %7 = arith.select %3, %5, %6 : vector<8x18xi1>, vector<8x18xf32>
    %cst_3 = arith.constant dense<0xFF800000> : vector<8xf32>
    %8 = vector.multi_reduction <maximumf>, %7, %cst_3 [1] : vector<8x18xf32> to vector<8xf32>
    %9 = vector.shape_cast %8 : vector<8xf32> to vector<8x1xf32>
    %10 = vector.broadcast %9 : vector<8x1xf32> to vector<8x18xf32>
    %11 = arith.subf %7, %10 : vector<8x18xf32>
    %12 = math.exp %11 : vector<8x18xf32>
    %cst_4 = arith.constant dense<0.000000e+00> : vector<8xf32>
    %13 = vector.multi_reduction <add>, %12, %cst_4 [1] : vector<8x18xf32> to vector<8xf32>
    %14 = vector.shape_cast %13 : vector<8xf32> to vector<8x1xf32>
    %15 = tpu.reciprocal %14 {approx = true} : vector<8x1xf32> -> vector<8x1xf32>
    %16 = arith.mulf %14, %15 : vector<8x1xf32>
    %cst_5 = arith.constant 2.000000e+00 : f32
    %17 = vector.broadcast %cst_5 : f32 to vector<8x1xf32>
    %18 = arith.subf %17, %16 : vector<8x1xf32>
    %19 = arith.mulf %15, %18 : vector<8x1xf32>
    %20 = vector.broadcast %19 : vector<8x1xf32> to vector<8x18xf32>
    %21 = arith.mulf %12, %20 : vector<8x18xf32>
    %c8 = arith.constant 8 : index
    %c0_6 = arith.constant 0 : index
    %22 = vector.load %arg3[%c8, %c0_6] : memref<176x128xf32, #tpu.memory_space<vmem>>, vector<18x32xf32>
    %c32 = arith.constant 32 : index
    %c0_7 = arith.constant 0 : index
    %23 = vector.load %arg3[%c32, %c0_7] : memref<176x128xf32, #tpu.memory_space<vmem>>, vector<96x32xf32>
    %c128 = arith.constant 128 : index
    %c0_8 = arith.constant 0 : index
    %24 = vector.load %arg3[%c128, %c0_8] : memref<176x128xf32, #tpu.memory_space<vmem>>, vector<1x32xf32>
    %cst_9 = arith.constant dense<0.000000e+00> : vector<8x32xf32>
    %25 = tpu.matmul %21, %22, %cst_9 {dimension_numbers = #tpu.dot_dimension_numbers<[1], [0], [0], [1], [0, 0, 1, 1], [], []>} : vector<8x18xf32>, vector<18x32xf32>, vector<8x32xf32> -> vector<8x32xf32>
    %c0_10 = arith.constant 0 : index
    %c0_11 = arith.constant 0 : index
    %26 = vector.load %arg2[%c0_10, %c0_11] : memref<8x96xf32, #tpu.memory_space<vmem>>, vector<8x96xf32>
    %cst_12 = arith.constant dense<0.000000e+00> : vector<8x32xf32>
    %27 = tpu.matmul %26, %23, %cst_12 {dimension_numbers = #tpu.dot_dimension_numbers<[1], [0], [0], [1], [0, 0, 1, 1], [], []>} : vector<8x96xf32>, vector<96x32xf32>, vector<8x32xf32> -> vector<8x32xf32>
    %28 = arith.addf %25, %27 : vector<8x32xf32>
    %29 = vector.broadcast %24 : vector<1x32xf32> to vector<8x32xf32>
    %30 = arith.addf %28, %29 : vector<8x32xf32>
    %cst_13 = arith.constant 0.000000e+00 : f32
    %31 = vector.broadcast %cst_13 : f32 to vector<8x32xf32>
    %32 = arith.cmpf ogt, %30, %31 : vector<8x32xf32>
    %cst_14 = arith.constant 0.00999999977 : f32
    %33 = vector.broadcast %cst_14 : f32 to vector<8x32xf32>
    %34 = arith.mulf %33, %30 : vector<8x32xf32>
    %35 = arith.select %32, %30, %34 : vector<8x32xi1>, vector<8x32xf32>
    %c136 = arith.constant 136 : index
    %c0_15 = arith.constant 0 : index
    %36 = vector.load %arg3[%c136, %c0_15] : memref<176x128xf32, #tpu.memory_space<vmem>>, vector<32x128xf32>
    %c168 = arith.constant 168 : index
    %c0_16 = arith.constant 0 : index
    %37 = vector.load %arg3[%c168, %c0_16] : memref<176x128xf32, #tpu.memory_space<vmem>>, vector<1x128xf32>
    %cst_17 = arith.constant dense<0.000000e+00> : vector<8x128xf32>
    %38 = tpu.matmul %35, %36, %cst_17 {dimension_numbers = #tpu.dot_dimension_numbers<[1], [0], [0], [1], [0, 0, 1, 1], [], []>} : vector<8x32xf32>, vector<32x128xf32>, vector<8x128xf32> -> vector<8x128xf32>
    %39 = vector.broadcast %37 : vector<1x128xf32> to vector<8x128xf32>
    %40 = arith.addf %38, %39 : vector<8x128xf32>
    %c0_18 = arith.constant 0 : index
    %c0_19 = arith.constant 0 : index
    %41 = vector.load %arg4[%c0_18, %c0_19] : memref<8x128xf32, #tpu.memory_space<vmem>>, vector<8x128xf32>
    tpu.vector_store %arg4[%c0_18, %c0_19], %40 {strides = array<i32>} : memref<8x128xf32, #tpu.memory_space<vmem>>, vector<8x128xf32>,
    return
  }
  func.func @transform_0(%arg0: i32) -> (i32, i32) {
    %c0_i32 = arith.constant 0 : i32
    %c0_i32_0 = arith.constant 0 : i32
    return %arg0, %c0_i32 : i32, i32
  }
  func.func @transform_1(%arg0: i32) -> (i32, i32) {
    %c0_i32 = arith.constant 0 : i32
    %c0_i32_0 = arith.constant 0 : i32
    return %arg0, %c0_i32 : i32, i32
  }
  func.func @transform_2(%arg0: i32) -> (i32, i32) {
    %c0_i32 = arith.constant 0 : i32
    %c0_i32_0 = arith.constant 0 : i32
    %c0_i32_1 = arith.constant 0 : i32
    return %c0_i32, %c0_i32_0 : i32, i32
  }
  func.func @transform_3(%arg0: i32) -> (i32, i32) {
    %c0_i32 = arith.constant 0 : i32
    %c0_i32_0 = arith.constant 0 : i32
    return %arg0, %c0_i32 : i32, i32
  }
}

</mosaic_0001>

<llo_original>
// kernel: tpu_custom_call.1
$region0: #{tpu_custom_call.1}
  #allocation0 [shape = 'u32[]', space=smem, size = 0x4, offset = 0x4, fixed_abs, tag = 'smem constant byte address 0x4 - core index']
  #allocation1 [shape = 'u32[144,128]{1,0:T(1,128)}', space=vmem, size = 0x12000, scoped, tag = 'internal scratch']
  %s0 = inlined_call_operand.hbm [shape: s32[24,18], index: 0, kind: input, shape index: {}]
  %s1 = inlined_call_operand.hbm [shape: f32[24,96], index: 1, kind: input, shape index: {}]
  %s2 = inlined_call_operand.hbm [shape: f32[176,128], index: 2, kind: input, shape index: {}]
  %s3 = inlined_call_operand.hbm [shape: f32[24,128], index: 3, kind: output, shape index: {}]
  %s4 = sld [smem:[#allocation0]]
  $region57: #{tpu_custom_call.1} parent=0
    _
  %s6 = ssub.s32 1, %s4
  %s7 = scalar_select 0, %s6, %s4
  $region1: #{tpu_custom_call.1} parent=0
    #allocation2 [shape = 'u8[8192]{0}', space=vmem, size = 0x2000, scoped, tag = 'input window, operand 0']
    #allocation3 [shape = 's32[2]{0}', space=sflag, size = 0x8, scoped, tag = 'scoped memory for tpu_custom_call.1']
    #allocation4 [shape = 's32[2]{0}', space=sflag, size = 0x8, scoped, tag = 'scoped memory for tpu_custom_call.1']
    #allocation5 [shape = 'u8[8192]{0}', space=vmem, size = 0x2000, scoped, tag = 'input window, operand 1']
    #allocation6 [shape = 's32[2]{0}', space=sflag, size = 0x8, scoped, tag = 'scoped memory for tpu_custom_call.1']
    #allocation7 [shape = 'u8[90112]{0}', space=vmem, size = 0x16000, scoped, tag = 'input window, operand 2, single buffered']
    #allocation8 [shape = 'u8[8192]{0}', space=vmem, size = 0x2000, scoped, tag = 'output window, operand 0']
    %8 = vsyncpa [#allocation3], 0
    %s9 = scalar_lea.sflag [#allocation3], 1
    %10 = vsyncpa %s9, 0
    %11 = vsyncpa [#allocation6], 0
    %s12 = scalar_lea.sflag [#allocation6], 1
    %13 = vsyncpa %s12, 0
    %14 = vsyncpa [#allocation4], 0
    %s15 = scalar_lea.sflag [#allocation4], 1
    %16 = vsyncpa %s15, 0
    loop: start=0, step=1, limit=5
    $region2: #{tpu_custom_call.1} parent=1 // loop_pre_header
      _
    $region3: #{tpu_custom_call.1} parent=1 // loop_header
      %s18 = sphi 0, %s22
      %p19 = scmp.ge.s32.totalorder %s18, 5
      %s28 = sphi 0, %s30
      %s31 = sphi 0, %s28
      %s32 = sphi 0, %s31
      %s48 = sphi 0, %s32
      %s54 = sphi 0, %s56
      %s57 = sphi 0, %s54
      %s58 = sphi 0, %s57
      %s74 = sphi 0, %s58
      %s78 = sphi 0, %s78
      %s80 = sphi 0, %s78
      %s81 = sphi 0, %s80
      %s95 = sphi 0, %s81
      %s101 = sphi 0, %s103
      %s104 = sphi 0, %s101
      %s105 = sphi 0, %s104
      %s121 = sphi 0, %s105
    $region4: #{tpu_custom_call.1} parent=1 // loop_header_branch
      %21 = sbr.rel (%p19) target = $region8
    $region5: #{tpu_custom_call.1} parent=1 // loop_body
      %s23 = ssub.s32 %s18, 1
      %s24 = ssub.s32 %s18, 2
      %s25 = sadd.s32 %s18, 1
      %s26 = ssub.s32 %s18, %s25
      %p27 = scmp.eq.s32.totalorder %s26, 0
      %s29 = sadd.s32 %s28, 1
      %s30 = scalar_select %p27, %s28, %s29
      %p33 = pneg %p27
      %p34 = scmp.eq.s32.totalorder %s18, 2
      %p35 = por %p33, %p34
      %p36 = scmp.ne.s32.totalorder %s28, %s31
      %p37 = scmp.eq.s32.totalorder %s18, 0
      %p38 = por %p36, %p37
      %p39 = scmp.ne.s32.totalorder %s28, %s31
      %p40 = scmp.eq.s32.totalorder %s23, 2
      %p41 = por %p39, %p40
      %p42 = scmp.ne.s32.totalorder %s31, %s32
      %p43 = scmp.eq.s32.totalorder %s23, 0
      %p44 = por %p42, %p43
      %p45 = scmp.ne.s32.totalorder %s31, %s32
      %p46 = scmp.eq.s32.totalorder %s24, 2
      %p47 = por %p45, %p46
      %p49 = scmp.ne.s32.totalorder %s32, %s48
      %p50 = scmp.eq.s32.totalorder %s24, 0
      %p51 = por %p49, %p50
      %s52 = ssub.s32 %s18, %s25
      %p53 = scmp.eq.s32.totalorder %s52, 0
      %s55 = sadd.s32 %s54, 1
      %s56 = scalar_select %p53, %s54, %s55
      %p59 = pneg %p53
      %p60 = scmp.eq.s32.totalorder %s18, 2
      %p61 = por %p59, %p60
      %p62 = scmp.ne.s32.totalorder %s54, %s57
      %p63 = scmp.eq.s32.totalorder %s18, 0
      %p64 = por %p62, %p63
      %p65 = scmp.ne.s32.totalorder %s54, %s57
      %p66 = scmp.eq.s32.totalorder %s23, 2
      %p67 = por %p65, %p66
      %p68 = scmp.ne.s32.totalorder %s57, %s58
      %p69 = scmp.eq.s32.totalorder %s23, 0
      %p70 = por %p68, %p69
      %p71 = scmp.ne.s32.totalorder %s57, %s58
      %p72 = scmp.eq.s32.totalorder %s24, 2
      %p73 = por %p71, %p72
      %p75 = scmp.ne.s32.totalorder %s58, %s74
      %p76 = scmp.eq.s32.totalorder %s24, 0
      %p77 = por %p75, %p76
      %s79 = sadd.s32 %s78, 1
      %p82 = scmp.eq.s32.totalorder %s18, 2
      %p83 = scmp.ne.s32.totalorder %s78, %s80
      %p84 = scmp.eq.s32.totalorder %s18, 0
      %p85 = por %p83, %p84
      %p86 = scmp.ne.s32.totalorder %s78, %s80
      %p87 = scmp.eq.s32.totalorder %s23, 2
      %p88 = por %p86, %p87
      %p89 = scmp.ne.s32.totalorder %s80, %s81
      %p90 = scmp.eq.s32.totalorder %s23, 0
      %p91 = por %p89, %p90
      %p92 = scmp.ne.s32.totalorder %s80, %s81
      %p93 = scmp.eq.s32.totalorder %s24, 2
      %p94 = por %p92, %p93
      %p96 = scmp.ne.s32.totalorder %s81, %s95
      %p97 = scmp.eq.s32.totalorder %s24, 0
      %p98 = por %p96, %p97
      %s99 = ssub.s32 %s18, %s25
      %p100 = scmp.eq.s32.totalorder %s99, 0
      %s102 = sadd.s32 %s101, 1
      %s103 = scalar_select %p100, %s101, %s102
      %p106 = pneg %p100
      %p107 = scmp.eq.s32.totalorder %s18, 2
      %p108 = por %p106, %p107
      %p109 = scmp.ne.s32.totalorder %s101, %s104
      %p110 = scmp.eq.s32.totalorder %s18, 0
      %p111 = por %p109, %p110
      %p112 = scmp.ne.s32.totalorder %s101, %s104
      %p113 = scmp.eq.s32.totalorder %s23, 2
      %p114 = por %p112, %p113
      %p115 = scmp.ne.s32.totalorder %s104, %s105
      %p116 = scmp.eq.s32.totalorder %s23, 0
      %p117 = por %p115, %p116
      %p118 = scmp.ne.s32.totalorder %s104, %s105
      %p119 = scmp.eq.s32.totalorder %s24, 2
      %p120 = por %p118, %p119
      %p122 = scmp.ne.s32.totalorder %s105, %s121
      %p123 = scmp.eq.s32.totalorder %s24, 0
      %p124 = por %p122, %p123
      %p125 = scmp.le.s32.totalorder 1, %s18
      %p126 = scmp.lt.s32.totalorder %s18, 4
      %p127 = pnand %p125, %p126
      %p128 = pneg %p127
      // Predicated region
      $region9: #{tpu_custom_call.1} parent=5 // pred_check
        _
      $region10: #{tpu_custom_call.1} parent=5 // pred_check_branch
        %130 = sbr.rel (%p127) target = $region12
      $region11: #{tpu_custom_call.1} parent=5 // pred_region
        %s131 = ssub.s32 %s18, 1
        // Predicated region
        $region13: #{tpu_custom_call.1} parent=11 // pred_check
          %p132 = pneg %p91
        $region14: #{tpu_custom_call.1} parent=11 // pred_check_branch
          %134 = sbr.rel (%p132) target = $region16
        $region15: #{tpu_custom_call.1} parent=11 // pred_region
          %s136 = ssub.s32 2816, 2816
          %137 = vsyncadd [#allocation6], %s136
          %s138 = sshll.u32 [#allocation7], 4
          %s139 = int_to_ptr.vmem [resolvable:$true] %s138
          %144 = dma.hbm_to_vmem [thread:$0]  %s2, 2816, %s139, [#allocation6], 128, 128, 8
        $region16: #{tpu_custom_call.1} parent=11 // pred_fallthru
          _
      $region12: #{tpu_custom_call.1} parent=5 // pred_fallthru
        _
      %p145 = scmp.lt.s32.totalorder %s18, 3
      // Predicated region
      $region17: #{tpu_custom_call.1} parent=5 // pred_check
        %p146 = pneg %p145
      $region18: #{tpu_custom_call.1} parent=5 // pred_check_branch
        %148 = sbr.rel (%p146) target = $region20
      $region19: #{tpu_custom_call.1} parent=5 // pred_region
        // Predicated region
        $region21: #{tpu_custom_call.1} parent=19 // pred_check
          %p149 = pneg %p38
        $region22: #{tpu_custom_call.1} parent=19 // pred_check_branch
          %151 = sbr.rel (%p149) target = $region24
        $region23: #{tpu_custom_call.1} parent=19 // pred_region
          %s152 = sand.u32 %s28, 1
          %s153 = scalar_lea.sflag [#allocation3], %s152
          %s154 = sand.u32 %s28, 1
          %s155 = smul.addr %s154, 8
          %s156 = scalar_lea.vmem [#allocation2], %s155
          %s158 = ssub.s32 128, 128
          %159 = vsyncadd %s153, %s158
          %s160 = smul.addr %s18, 128
          %s161 = scalar_lea.hbm %s0, %s160
          %s163 = sshll.u32 %s156, 4
          %s164 = int_to_ptr.vmem [resolvable:$true] %s163
          %166 = dma.hbm_to_vmem [thread:$0]  %s161, 128, %s164, %s153
        $region24: #{tpu_custom_call.1} parent=19 // pred_fallthru
          _
        // Predicated region
        $region25: #{tpu_custom_call.1} parent=19 // pred_check
          %p167 = pneg %p64
        $region26: #{tpu_custom_call.1} parent=19 // pred_check_branch
          %169 = sbr.rel (%p167) target = $region28
        $region27: #{tpu_custom_call.1} parent=19 // pred_region
          %s170 = sand.u32 %s18, 1
          %s171 = scalar_lea.sflag [#allocation6], %s170
          %s172 = sand.u32 %s54, 1
          %s173 = smul.addr %s172, 8
          %s174 = scalar_lea.vmem [#allocation5], %s173
          %s176 = ssub.s32 128, 128
          %177 = vsyncadd %s171, %s176
          %s178 = smul.addr %s18, 128
          %s179 = scalar_lea.hbm %s1, %s178
          %s181 = sshll.u32 %s174, 4
          %s182 = int_to_ptr.vmem [resolvable:$true] %s181
          %184 = dma.hbm_to_vmem [thread:$0]  %s179, 128, %s182, %s171
        $region28: #{tpu_custom_call.1} parent=19 // pred_fallthru
          _
      $region20: #{tpu_custom_call.1} parent=5 // pred_fallthru
        _
      %p185 = scmp.le.s32.totalorder 1, %s18
      %p186 = scmp.lt.s32.totalorder %s18, 4
      %p187 = pnand %p185, %p186
      %p188 = pneg %p187
      // Predicated region
      $region29: #{tpu_custom_call.1} parent=5 // pred_check
        _
      $region30: #{tpu_custom_call.1} parent=5 // pred_check_branch
        %190 = sbr.rel (%p187) target = $region32
      $region31: #{tpu_custom_call.1} parent=5 // pred_region
        %s191 = ssub.s32 %s18, 1
        %s192 = sand.u32 %s31, 1
        %s193 = scalar_lea.sflag [#allocation3], %s192
        %s194 = sand.u32 %s31, 1
        %s195 = smul.addr %s194, 8
        %s196 = scalar_lea.vmem [#allocation2], %s195
        // Predicated region
        $region33: #{tpu_custom_call.1} parent=31 // pred_check
          %p197 = pneg %p44
        $region34: #{tpu_custom_call.1} parent=31 // pred_check_branch
          %199 = sbr.rel (%p197) target = $region36
        $region35: #{tpu_custom_call.1} parent=31 // pred_region
          %200 = dma.done %s193, 128
        $region36: #{tpu_custom_call.1} parent=31 // pred_fallthru
          _
        %s201 = sand.u32 %s23, 1
        %s202 = scalar_lea.sflag [#allocation6], %s201
        %s203 = sand.u32 %s57, 1
        %s204 = smul.addr %s203, 8
        %s205 = scalar_lea.vmem [#allocation5], %s204
        // Predicated region
        $region37: #{tpu_custom_call.1} parent=31 // pred_check
          %p206 = pneg %p70
        $region38: #{tpu_custom_call.1} parent=31 // pred_check_branch
          %208 = sbr.rel (%p206) target = $region40
        $region39: #{tpu_custom_call.1} parent=31 // pred_region
          %209 = dma.done %s202, 128
        $region40: #{tpu_custom_call.1} parent=31 // pred_fallthru
          _
        // Predicated region
        $region41: #{tpu_custom_call.1} parent=31 // pred_check
          %p210 = pneg %p91
        $region42: #{tpu_custom_call.1} parent=31 // pred_check_branch
          %212 = sbr.rel (%p210) target = $region44
        $region43: #{tpu_custom_call.1} parent=31 // pred_region
          %213 = dma.done [#allocation6], 2816
        $region44: #{tpu_custom_call.1} parent=31 // pred_fallthru
          _
        %s214 = sand.u32 %s31, 1
        %s215 = scalar_lea.sflag [#allocation3], %s214
        %s216 = sand.u32 %s31, 1
        %s217 = smul.addr %s216, 8
        %s218 = scalar_lea.vmem [#allocation2], %s217
        %p219 = pneg %p44
        %p220 = pneg %p41
        %s221 = sand.u32 %s23, 1
        %s222 = scalar_lea.sflag [#allocation6], %s221
        %s223 = sand.u32 %s57, 1
        %s224 = smul.addr %s223, 8
        %s225 = scalar_lea.vmem [#allocation5], %s224
        %p226 = pneg %p70
        %p227 = pneg %p67
        %p228 = pneg %p91
        %p229 = pneg %p88
        %p230 = pneg %p117
        %p231 = pneg %p114
        %s232 = sand.u32 %s104, 1
        %s233 = scalar_lea.sflag [#allocation4], %s232
        %s234 = sand.u32 %s104, 1
        %s235 = smul.addr %s234, 8
        %s236 = scalar_lea.vmem [#allocation8], %s235
        %v237 = vld [vmem:[#allocation7] sm:$0x1]
        %v238 = vld [vmem:[%s196] sm:$0xff]
        %vm239 = vcmp.ne.s32.totalorder %v238, 4294967295
        %v240 = vlaneseq
        %v241 = vshrl.u32 %v240, 7
        %v242 = vsub.s32 0, %v241
        %v243 = vrot.slane %v237, %v242
        %v244 = vsel %vm239, %v243, -1000000.0
        %vm245 = vcmask 146432
        %v246 = vsel %vm245, %v244, -inf
        %247 = vmax.xlane.f32.xlu0 %v246
        %v248 = vpop.xlane.xlu0 %247
        %v249 = vsub.f32 %v244, %v248
        %v250 = vmul.f32 %v249, 1.442695
        %v251 = vpow.pop %v250
        %v252 = vsel %vm245, %v251, 0.0
        %253 = vadd.xlane.f32.xlu0 %v252
        %v254 = vpop.xlane.xlu0 %253
        %v255 = vrcp.pop %v254
        %v256 = vmul.f32 %v254, %v255
        %v257 = vsub.f32 2.0, %v256
        %v258 = vmul.f32 %v255, %v257
        %v259 = vmul.f32 %v251, %v258
        %v260 = vld [vmem:[#allocation7 + $0x8] sm:$0xff]
        %v261 = vld [vmem:[#allocation7 + $0x10] sm:$0xff]
        %v262 = vld [vmem:[#allocation7 + $0x18] sm:$0x3]
        %v263 = vld [vmem:[#allocation7 + $0x20] sm:$0xff]
        %v264 = vld [vmem:[#allocation7 + $0x28] sm:$0xff]
        %v265 = vld [vmem:[#allocation7 + $0x30] sm:$0xff]
        %v266 = vld [vmem:[#allocation7 + $0x38] sm:$0xff]
        %v267 = vld [vmem:[#allocation7 + $0x40] sm:$0xff]
        %v268 = vld [vmem:[#allocation7 + $0x48] sm:$0xff]
        %v269 = vld [vmem:[#allocation7 + $0x50] sm:$0xff]
        %v270 = vld [vmem:[#allocation7 + $0x58] sm:$0xff]
        %v271 = vld [vmem:[#allocation7 + $0x60] sm:$0xff]
        %v272 = vld [vmem:[#allocation7 + $0x68] sm:$0xff]
        %v273 = vld [vmem:[#allocation7 + $0x70] sm:$0xff]
        %v274 = vld [vmem:[#allocation7 + $0x78] sm:$0xff]
        %v275 = vld [vmem:[#allocation7 + $0x80] sm:$0x1]
        %v276 = vld [vmem:[%s205] sm:$0xff]
        %vm277 = vcmask 785408
        %v279 = vsel %vm277, %v276, 0
        %281 = vmatprep.subr.mxu0 0.0
        %282 = vmatpush1.msra.mxu0 0.0
        %283 = vmatprep.subr.mxu0 0.0
        %284 = vmatpush1.msra.mxu0 0.0
        %285 = vmatprep.subr.mxu0 0.0
        %286 = vmatpush1.msra.mxu0 0.0
        %287 = vmatprep.subr.mxu0 0.0
        %288 = vmatpush1.msra.mxu0 0.0
        %289 = vmatprep.subr.mxu0 0.0
        %290 = vmatpush1.msra.mxu0 %v274
        %291 = vmatprep.subr.mxu0 0.0
        %292 = vmatpush1.msra.mxu0 %v273
        %293 = vmatprep.subr.mxu0 0.0
        %294 = vmatpush1.msra.mxu0 %v272
        %295 = vmatprep.subr.mxu0 0.0
        %296 = vmatpush1.msra.mxu0 %v271
        %297 = vmatprep.subr.mxu0 0.0
        %298 = vmatpush1.msra.mxu0 %v270
        %299 = vmatprep.subr.mxu0 0.0
        %300 = vmatpush1.msra.mxu0 %v269
        %301 = vmatprep.subr.mxu0 0.0
        %302 = vmatpush1.msra.mxu0 %v268
        %303 = vmatprep.subr.mxu0 0.0
        %304 = vmatpush1.msra.mxu0 %v267
        %305 = vmatprep.subr.mxu0 0.0
        %306 = vmatpush1.msra.mxu0 %v266
        %307 = vmatprep.subr.mxu0 0.0
        %308 = vmatpush1.msra.mxu0 %v265
        %309 = vmatprep.subr.mxu0 0.0
        %310 = vmatpush1.msra.mxu0 %v264
        %311 = vmatprep.subr.mxu0 0.0
        %312 = vmatpush1.msra.mxu0 %v263
        %313 = vmatprep.subr.mxu0 0.0
        %314 = vmatpush2.msra.mxu0 0.0
        %315 = vmatprep.subr.mxu0 0.0
        %316 = vmatpush2.msra.mxu0 0.0
        %317 = vmatprep.subr.mxu0 0.0
        %318 = vmatpush2.msra.mxu0 0.0
        %319 = vmatprep.subr.mxu0 0.0
        %320 = vmatpush2.msra.mxu0 0.0
        %321 = vmatprep.subr.mxu0 0.0
        %322 = vmatpush2.msra.mxu0 0.0
        %323 = vmatprep.subr.mxu0 0.0
        %324 = vmatpush2.msra.mxu0 0.0
        %325 = vmatprep.subr.mxu0 0.0
        %326 = vmatpush2.msra.mxu0 0.0
        %327 = vmatprep.subr.mxu0 0.0
        %328 = vmatpush2.msra.mxu0 0.0
        %329 = vmatprep.subr.mxu0 0.0
        %330 = vmatpush2.msra.mxu0 0.0
        %331 = vmatprep.subr.mxu0 0.0
        %332 = vmatpush2.msra.mxu0 0.0
        %333 = vmatprep.subr.mxu0 0.0
        %334 = vmatpush2.msra.mxu0 0.0
        %335 = vmatprep.subr.mxu0 0.0
        %336 = vmatpush2.msra.mxu0 0.0
        %337 = vmatprep.subr.mxu0 0.0
        %338 = vmatpush2.msra.mxu0 0.0
        %339 = vmatprep.subr.mxu0 0.0
        %340 = vmatpush2.msra.mxu0 0.0
        %341 = vmatprep.subr.mxu0 0.0
        %342 = vmatpush2.msra.mxu0 0.0
        %343 = vmatprep.subr.mxu0 0.0
        %344 = vmatpush2.msra.mxu0 0.0
        %345 = vmatprep.mubr.f32.mxu0 0.0
        %346 = vmatmul.mubr.f32.gmra.mxu0 %v279
        %v347 = vpop.f32.mrf.mxu0
        %v348 = vadd.f32 0.0, %v347
        %v349 = vpop.f32.mrf.mxu0
        %350 = vdwg.mxu0
        %v352 = vsel %vm245, %v259, 0
        %vm354 = vcmask 1041408
        %v356 = vsel %vm354, %v262, 0
        %358 = vmatprep.subr.mxu0 0.0
        %359 = vmatpush1.msra.mxu0 0.0
        %360 = vmatprep.subr.mxu0 0.0
        %361 = vmatpush1.msra.mxu0 0.0
        %362 = vmatprep.subr.mxu0 0.0
        %363 = vmatpush1.msra.mxu0 0.0
        %364 = vmatprep.subr.mxu0 0.0
        %365 = vmatpush1.msra.mxu0 0.0
        %366 = vmatprep.subr.mxu0 0.0
        %367 = vmatpush1.msra.mxu0 0.0
        %368 = vmatprep.subr.mxu0 0.0
        %369 = vmatpush1.msra.mxu0 0.0
        %370 = vmatprep.subr.mxu0 0.0
        %371 = vmatpush1.msra.mxu0 0.0
        %372 = vmatprep.subr.mxu0 0.0
        %373 = vmatpush1.msra.mxu0 0.0
        %374 = vmatprep.subr.mxu0 0.0
        %375 = vmatpush1.msra.mxu0 0.0
        %376 = vmatprep.subr.mxu0 0.0
        %377 = vmatpush1.msra.mxu0 0.0
        %378 = vmatprep.subr.mxu0 0.0
        %379 = vmatpush1.msra.mxu0 0.0
        %380 = vmatprep.subr.mxu0 0.0
        %381 = vmatpush1.msra.mxu0 0.0
        %382 = vmatprep.subr.mxu0 0.0
        %383 = vmatpush1.msra.mxu0 0.0
        %384 = vmatprep.subr.mxu0 0.0
        %385 = vmatpush1.msra.mxu0 %v356
        %386 = vmatprep.subr.mxu0 0.0
        %387 = vmatpush1.msra.mxu0 %v261
        %388 = vmatprep.subr.mxu0 0.0
        %389 = vmatpush1.msra.mxu0 %v260
        %390 = vmatprep.subr.mxu0 0.0
        %391 = vmatpush2.msra.mxu0 0.0
        %392 = vmatprep.subr.mxu0 0.0
        %393 = vmatpush2.msra.mxu0 0.0
        %394 = vmatprep.subr.mxu0 0.0
        %395 = vmatpush2.msra.mxu0 0.0
        %396 = vmatprep.subr.mxu0 0.0
        %397 = vmatpush2.msra.mxu0 0.0
        %398 = vmatprep.subr.mxu0 0.0
        %399 = vmatpush2.msra.mxu0 0.0
        %400 = vmatprep.subr.mxu0 0.0
        %401 = vmatpush2.msra.mxu0 0.0
        %402 = vmatprep.subr.mxu0 0.0
        %403 = vmatpush2.msra.mxu0 0.0
        %404 = vmatprep.subr.mxu0 0.0
        %405 = vmatpush2.msra.mxu0 0.0
        %406 = vmatprep.subr.mxu0 0.0
        %407 = vmatpush2.msra.mxu0 0.0
        %408 = vmatprep.subr.mxu0 0.0
        %409 = vmatpush2.msra.mxu0 0.0
        %410 = vmatprep.subr.mxu0 0.0
        %411 = vmatpush2.msra.mxu0 0.0
        %412 = vmatprep.subr.mxu0 0.0
        %413 = vmatpush2.msra.mxu0 0.0
        %414 = vmatprep.subr.mxu0 0.0
        %415 = vmatpush2.msra.mxu0 0.0
        %416 = vmatprep.subr.mxu0 0.0
        %417 = vmatpush2.msra.mxu0 0.0
        %418 = vmatprep.subr.mxu0 0.0
        %419 = vmatpush2.msra.mxu0 0.0
        %420 = vmatprep.subr.mxu0 0.0
        %421 = vmatpush2.msra.mxu0 0.0
        %422 = vmatprep.mubr.f32.mxu0 0.0
        %423 = vmatmul.mubr.f32.gmra.mxu0 %v352
        %v424 = vpop.f32.mrf.mxu0
        %v425 = vadd.f32 %v348, %v424
        %v426 = vpop.f32.mrf.mxu0
        %427 = vdwg.mxu0
        %v428 = vlaneseq
        %v429 = vshrl.u32 %v428, 7
        %v430 = vsub.s32 0, %v429
        %v431 = vrot.slane %v275, %v430
        %v432 = vadd.f32 %v425, %v431
        %vm433 = vcmp.gt.f32.partialorder %v432, 0.0
        %v434 = vmul.f32 %v432, 0.01
        %v435 = vsel %vm433, %v432, %v434
        %v436 = vld [vmem:[#allocation7 + $0x88] sm:$0xff]
        %v437 = vld [vmem:[#allocation7 + $0x90] sm:$0xff]
        %v438 = vld [vmem:[#allocation7 + $0x98] sm:$0xff]
        %v439 = vld [vmem:[#allocation7 + $0xa0] sm:$0xff]
        %v440 = vld [vmem:[#allocation7 + $0xa8] sm:$0x1]
        %v441 = vlaneseq
        %v442 = vshrl.u32 %v441, 7
        %v443 = vsub.s32 0, %v442
        %v444 = vrot.slane %v440, %v443
        %vm445 = vcmask 261120
        %v447 = vsel %vm445, %v435, 0
        %449 = vmatprep.subr.mxu0 0.0
        %450 = vmatpush1.msra.mxu0 0.0
        %451 = vmatprep.subr.mxu0 0.0
        %452 = vmatpush1.msra.mxu0 0.0
        %453 = vmatprep.subr.mxu0 0.0
        %454 = vmatpush1.msra.mxu0 0.0
        %455 = vmatprep.subr.mxu0 0.0
        %456 = vmatpush1.msra.mxu0 0.0
        %457 = vmatprep.subr.mxu0 0.0
        %458 = vmatpush1.msra.mxu0 0.0
        %459 = vmatprep.subr.mxu0 0.0
        %460 = vmatpush1.msra.mxu0 0.0
        %461 = vmatprep.subr.mxu0 0.0
        %462 = vmatpush1.msra.mxu0 0.0
        %463 = vmatprep.subr.mxu0 0.0
        %464 = vmatpush1.msra.mxu0 0.0
        %465 = vmatprep.subr.mxu0 0.0
        %466 = vmatpush1.msra.mxu0 0.0
        %467 = vmatprep.subr.mxu0 0.0
        %468 = vmatpush1.msra.mxu0 0.0
        %469 = vmatprep.subr.mxu0 0.0
        %470 = vmatpush1.msra.mxu0 0.0
        %471 = vmatprep.subr.mxu0 0.0
        %472 = vmatpush1.msra.mxu0 0.0
        %473 = vmatprep.subr.mxu0 0.0
        %474 = vmatpush1.msra.mxu0 %v439
        %475 = vmatprep.subr.mxu0 0.0
        %476 = vmatpush1.msra.mxu0 %v438
        %477 = vmatprep.subr.mxu0 0.0
        %478 = vmatpush1.msra.mxu0 %v437
        %479 = vmatprep.subr.mxu0 0.0
        %480 = vmatpush1.msra.mxu0 %v436
        %481 = vmatprep.subr.mxu0 0.0
        %482 = vmatpush2.msra.mxu0 0.0
        %483 = vmatprep.subr.mxu0 0.0
        %484 = vmatpush2.msra.mxu0 0.0
        %485 = vmatprep.subr.mxu0 0.0
        %486 = vmatpush2.msra.mxu0 0.0
        %487 = vmatprep.subr.mxu0 0.0
        %488 = vmatpush2.msra.mxu0 0.0
        %489 = vmatprep.subr.mxu0 0.0
        %490 = vmatpush2.msra.mxu0 0.0
        %491 = vmatprep.subr.mxu0 0.0
        %492 = vmatpush2.msra.mxu0 0.0
        %493 = vmatprep.subr.mxu0 0.0
        %494 = vmatpush2.msra.mxu0 0.0
        %495 = vmatprep.subr.mxu0 0.0
        %496 = vmatpush2.msra.mxu0 0.0
        %497 = vmatprep.subr.mxu0 0.0
        %498 = vmatpush2.msra.mxu0 0.0
        %499 = vmatprep.subr.mxu0 0.0
        %500 = vmatpush2.msra.mxu0 0.0
        %501 = vmatprep.subr.mxu0 0.0
        %502 = vmatpush2.msra.mxu0 0.0
        %503 = vmatprep.subr.mxu0 0.0
        %504 = vmatpush2.msra.mxu0 0.0
        %505 = vmatprep.subr.mxu0 0.0
        %506 = vmatpush2.msra.mxu0 0.0
        %507 = vmatprep.subr.mxu0 0.0
        %508 = vmatpush2.msra.mxu0 0.0
        %509 = vmatprep.subr.mxu0 0.0
        %510 = vmatpush2.msra.mxu0 0.0
        %511 = vmatprep.subr.mxu0 0.0
        %512 = vmatpush2.msra.mxu0 0.0
        %513 = vmatprep.mubr.f32.mxu0 0.0
        %514 = vmatmul.mubr.f32.gmra.mxu0 %v447
        %v515 = vpop.f32.mrf.mxu0
        %v516 = vadd.f32 %v444, %v515
        %v517 = vpop.f32.mrf.mxu0
        %518 = vdwg.mxu0
        %519 = vst [vmem:[%s236] sm:$0xff] %v516
        %s520 = sand.u32 %s104, 1
        %s521 = scalar_lea.sflag [#allocation4], %s520
        %s522 = sand.u32 %s104, 1
        %s523 = smul.addr %s522, 8
        %s524 = scalar_lea.vmem [#allocation8], %s523
        // Predicated region
        $region45: #{tpu_custom_call.1} parent=31 // pred_check
          %p525 = pneg %p114
        $region46: #{tpu_custom_call.1} parent=31 // pred_check_branch
          %527 = sbr.rel (%p525) target = $region48
        $region47: #{tpu_custom_call.1} parent=31 // pred_region
          %s529 = ssub.s32 128, 128
          %530 = vsyncadd %s521, %s529
          %s531 = smul.addr %s23, 128
          %s532 = scalar_lea.hbm %s3, %s531
          %s534 = sshll.u32 %s524, 4
          %s535 = int_to_ptr.vmem [resolvable:$true] %s534
          %537 = dma.vmem_to_hbm [thread:$0]  %s535, 128, %s532, %s521
        $region48: #{tpu_custom_call.1} parent=31 // pred_fallthru
          _
      $region32: #{tpu_custom_call.1} parent=5 // pred_fallthru
        _
      %p538 = scmp.le.s32.totalorder 2, %s18
      // Predicated region
      $region49: #{tpu_custom_call.1} parent=5 // pred_check
        %p539 = pneg %p538
      $region50: #{tpu_custom_call.1} parent=5 // pred_check_branch
        %541 = sbr.rel (%p539) target = $region52
      $region51: #{tpu_custom_call.1} parent=5 // pred_region
        %s542 = ssub.s32 %s18, 2
        // Predicated region
        $region53: #{tpu_custom_call.1} parent=51 // pred_check
          %p543 = pneg %p120
        $region54: #{tpu_custom_call.1} parent=51 // pred_check_branch
          %545 = sbr.rel (%p543) target = $region56
        $region55: #{tpu_custom_call.1} parent=51 // pred_region
          %s546 = sand.u32 %s105, 1
          %s547 = scalar_lea.sflag [#allocation4], %s546
          %s548 = sand.u32 %s105, 1
          %s549 = smul.addr %s548, 8
          %s550 = scalar_lea.vmem [#allocation8], %s549
          %551 = dma.done %s547, 128
        $region56: #{tpu_custom_call.1} parent=51 // pred_fallthru
          _
      $region52: #{tpu_custom_call.1} parent=5 // pred_fallthru
        _
    $region6: #{tpu_custom_call.1} parent=1 // loop_footer
      %s22 = sadd.s32 1, %s18
    $region7: #{tpu_custom_call.1} parent=1 // loop_footer_branch
      %17 = sbr.rel target = $region3
    $region8: #{tpu_custom_call.1} parent=1 // loop_exit
      _
    %552 = vsyncpa [#allocation3], 1
    %s553 = scalar_lea.sflag [#allocation3], 1
    %554 = vsyncpa %s553, 1
    %555 = vsyncpa [#allocation6], 1
    %s556 = scalar_lea.sflag [#allocation6], 1
    %557 = vsyncpa %s556, 1
    %558 = vsyncpa [#allocation4], 1
    %s559 = scalar_lea.sflag [#allocation4], 1
    %560 = vsyncpa %s559, 1

</llo_original>
